<compile_context>
chip_gen: v5e
topology: v5e:2x2
jax: 0.10.0
libtpu: 0.0.40
codegen_flags: <defaults>
</compile_context>

<pallas_src>
import functools

import jax
import jax.numpy as jnp
import numpy as np
from jax.experimental import pallas as pl
from jax.experimental.pallas import tpu as pltpu

LEAKY_SLOPE = 0.01  # torch.nn.LeakyReLU default


def _leaky_relu(x):
    return jnp.where(x > 0, x, LEAKY_SLOPE * x)


def _round_up(x, m):
    return ((x + m - 1) // m) * m


# ----------------------------------------------------------------------------
# Fused Pallas kernel: the whole CausalCNN for one (padded) batch element
# ----------------------------------------------------------------------------
def _fused_cnn_kernel(meta, x_ref, w_ref, b_ref, o_ref):
    """meta: static tuple of (kernel_size, dilation, has_residual) per block.

    x_ref : (1, C_pad, L_pad)        activations (channels x lanes)
    w_ref : (NW, K, C_pad, C_pad)    packed conv-tap / residual-1x1 weights
    b_ref : (NW, C_pad, 1)           packed biases
    o_ref : (1, C_pad, L_pad)
    """
    cur = x_ref[0]                      # (C_pad, L_pad) f32
    C, Lp = cur.shape

    zero_pads = {}                      # hoisted per-shift zero blocks

    def shift_right(h, s):
        # Causal lane shift with zero fill. Junk in the padded lane tail only
        # ever moves further right, so lanes < L stay exact.
        if s == 0:
            return h
        if s >= Lp:
            return jnp.zeros_like(h)
        if s not in zero_pads:
            zero_pads[s] = jnp.zeros((C, s), h.dtype)
        return jnp.concatenate([zero_pads[s], h[:, :Lp - s]], axis=1)

    def causal_conv(h, wi, k, d):
        # k per-tap MXU matmuls accumulated in f32 (no im2col materialization):
        #   out[:, l] = b + sum_t w[:, :, t] @ h[:, l - (k-1-t)*d]
        acc = None
        for t in range(k):
            s = (k - 1 - t) * d
            part = jnp.dot(w_ref[wi, t], shift_right(h, s),
                           preferred_element_type=jnp.float32)
            acc = part if acc is None else acc + part
        return acc + b_ref[wi]          # bias added once, after the dots

    wi = 0
    for (k, d, has_res) in meta:
        h1 = _leaky_relu(causal_conv(cur, wi, k, d))
        wi += 1
        h2 = _leaky_relu(causal_conv(h1, wi, k, d))
        wi += 1
        if has_res:                     # 1x1 residual conv lives in tap slot 0
            res = jnp.dot(w_ref[wi, 0], cur,
                          preferred_element_type=jnp.float32) + b_ref[wi]
            wi += 1
        else:
            res = cur
        cur = h2 + res                  # final=False in CausalCNN -> no ReLU
    o_ref[0] = cur.astype(o_ref.dtype)


# ----------------------------------------------------------------------------
# Wrapper: pad channels/length, pack weight slabs, single pallas_call
# ----------------------------------------------------------------------------
def causal_cnn_forward(blocks, x):
    """blocks: list of {'params', 'kernel_size', 'dilation'}; x: (B, Cin, L)."""
    B, cin0, L = x.shape
    k = max(blk["kernel_size"] for blk in blocks)

    chans = [cin0] + [blk["params"]["w1"].shape[0] for blk in blocks]
    C_pad = _round_up(max(chans), 8)          # sublane multiple (f32)
    L_pad = _round_up(max(L, 128), 128)       # lane-dense: multiple of 128
    cout_last = chans[-1]

    def pad_w(w):                             # (cout,cin,kw) -> (k,C_pad,C_pad)
        w = np.asarray(w, np.float32)
        co, ci, kw = w.shape
        out = np.zeros((k, C_pad, C_pad), np.float32)
        out[:kw, :co, :ci] = np.transpose(w, (2, 0, 1))
        return out

    def pad_b(b):                             # (cout,) -> (C_pad, 1)
        b = np.asarray(b, np.float32)
        out = np.zeros((C_pad, 1), np.float32)
        out[:b.shape[0], 0] = b
        return out

    meta, w_entries, b_entries = [], [], []
    for blk in blocks:
        p = blk["params"]
        has_res = "wres" in p
        meta.append((blk["kernel_size"], blk["dilation"], has_res))
        w_entries += [pad_w(p["w1"]), pad_w(p["w2"])]
        b_entries += [pad_b(p["b1"]), pad_b(p["b2"])]
        if has_res:
            w_entries.append(pad_w(p["wres"]))   # 1x1 -> lands in tap slot 0
            b_entries.append(pad_b(p["bres"]))

    w_slab = jnp.asarray(np.stack(w_entries))    # (NW, k, C_pad, C_pad)
    b_slab = jnp.asarray(np.stack(b_entries))    # (NW, C_pad, 1)

    x_pad = jnp.zeros((B, C_pad, L_pad), jnp.float32)
    x_pad = x_pad.at[:, :cin0, :L].set(x.astype(jnp.float32))

    kernel = functools.partial(_fused_cnn_kernel, tuple(meta))

    # Explicit VMEM budget (v7x: 64 MiB physical / 32 MiB scoped default).
    need_bytes = 4 * (4 * C_pad * L_pad            # in+out, double-buffered
                      + int(w_slab.size) + int(b_slab.size)
                      + 8 * C_pad * L_pad)         # live activation headroom
    vmem_limit = int(min(max(4 * need_bytes, 8 << 20), 48 << 20))

    out = pl.pallas_call(
        kernel,
        out_shape=jax.ShapeDtypeStruct((B, C_pad, L_pad), jnp.float32),
        grid_spec=pltpu.PrefetchScalarGridSpec(
            num_scalar_prefetch=0,
            grid=(B,),
            in_specs=[
                pl.BlockSpec((1, C_pad, L_pad), lambda b: (b, 0, 0)),
                pl.BlockSpec(w_slab.shape, lambda b: (0, 0, 0, 0)),
                pl.BlockSpec(b_slab.shape, lambda b: (0, 0, 0)),
            ],
            out_specs=pl.BlockSpec((1, C_pad, L_pad), lambda b: (b, 0, 0)),
        ),
        compiler_params=pltpu.CompilerParams(
            dimension_semantics=("parallel",),
            vmem_limit_bytes=vmem_limit,
        ),
    )(x_pad, w_slab, b_slab)

    return out[:, :cout_last, :L]


# ----------------------------------------------------------------------------
# CausalCNN parameter construction (mimics PyTorch Conv1d default init)
# ----------------------------------------------------------------------------
def init_causal_cnn(key, in_channels, channels, depth, out_channels,
                    kernel_size):
    blocks = []
    dilation = 1

    def conv_init(key, cout, cin, k):
        bound = 1.0 / np.sqrt(cin * k)
        k1, k2 = jax.random.split(key)
        w = jax.random.uniform(k1, (cout, cin, k), jnp.float32, -bound, bound)
        b = jax.random.uniform(k2, (cout,), jnp.float32, -bound, bound)
        return w, b

    for i in range(depth + 1):
        cin = in_channels if i == 0 else channels
        cout = out_channels if i == depth else channels
        key, k1, k2, k3 = jax.random.split(key, 4)
        w1, b1 = conv_init(k1, cout, cin, kernel_size)
        w2, b2 = conv_init(k2, cout, cout, kernel_size)
        p = {"w1": w1, "b1": b1, "w2": w2, "b2": b2}
        if cin != cout:
            wres, bres = conv_init(k3, cout, cin, 1)
            p["wres"] = wres
            p["bres"] = bres
        blocks.append({"params": p, "kernel_size": kernel_size,
                       "dilation": dilation})
        dilation *= 2
    return blocks


# ----------------------------------------------------------------------------
# Pure-JAX reference (verification only)
# ----------------------------------------------------------------------------
def _ref_block(x, p, k, d):
    P = (k - 1) * d
    dn = ("NCH", "OIH", "NCH")

    def conv(x, w, b, dil, pad):
        y = jax.lax.conv_general_dilated(
            x, w, window_strides=(1,), padding=[(pad, 0)],
            rhs_dilation=(dil,), dimension_numbers=dn)
        return y + b.reshape(1, -1, 1)

    h = conv(x, p["w1"], p["b1"], d, P)
    h = jnp.where(h > 0, h, LEAKY_SLOPE * h)
    h = conv(h, p["w2"], p["b2"], d, P)
    h = jnp.where(h > 0, h, LEAKY_SLOPE * h)
    res = x if "wres" not in p else conv(x, p["wres"], p["bres"], 1, 0)
    return h + res


def _ref_forward(blocks, x):
    for blk in blocks:
        x = _ref_block(x, blk["params"], blk["kernel_size"], blk["dilation"])
    return x


# ----------------------------------------------------------------------------
if __name__ == "__main__":
    key = jax.random.PRNGKey(0)

    # CausalCNN(in_channels=4, channels=8, depth=2, out_channels=4, kernel_size=3)
    in_channels, channels, depth, out_channels, kernel_size = 4, 8, 2, 4, 3
    B, L = 2, 16

    kparams, kx = jax.random.split(key)
    blocks = init_causal_cnn(kparams, in_channels, channels, depth,
                             out_channels, kernel_size)
    x = jax.random.normal(kx, (B, in_channels, L), jnp.float32)

    out = jax.block_until_ready(causal_cnn_forward(blocks, x))
    ref = jax.block_until_ready(_ref_forward(blocks, x))

    np.testing.assert_allclose(np.asarray(out), np.asarray(ref),
                               rtol=5e-4, atol=1e-5)
    assert out.shape == (B, out_channels, L)

    print("KERNEL_OK")
</pallas_src>

<mosaic_0001>
module attributes {stable_mosaic.version = 11 : i64} {
  func.func @_fused_cnn_kernel(%arg0: i32, %arg1: memref<1x8x128xf32, #tpu.memory_space<vmem>>, %arg2: memref<8x3x8x8xf32, #tpu.memory_space<vmem>>, %arg3: memref<8x8x1xf32, #tpu.memory_space<vmem>>, %arg4: memref<1x8x128xf32, #tpu.memory_space<vmem>>) attributes {dimension_semantics = [#tpu.dimension_semantics<parallel>], iteration_bounds = array<i64: 2>, scalar_prefetch = 0 : i64, scratch_operands = 0 : i64, tpu.core_type = #tpu.core_type<tc>, window_params = [{transform_indices = @transform_0, window_bounds = array<i64: 1, 8, 128>}, {pipeline_mode = #tpu.pipeline_mode<synchronous>, transform_indices = @transform_1, window_bounds = array<i64: 8, 3, 8, 8>}, {pipeline_mode = #tpu.pipeline_mode<synchronous>, transform_indices = @transform_2, window_bounds = array<i64: 8, 8, 1>}, {transform_indices = @transform_3, window_bounds = array<i64: 1, 8, 128>}]} {
    %c0 = arith.constant 0 : index
    %c0_0 = arith.constant 0 : index
    %c0_1 = arith.constant 0 : index
    %0 = vector.load %arg1[%c0, %c0_0, %c0_1] : memref<1x8x128xf32, #tpu.memory_space<vmem>>, vector<1x8x128xf32>
    %1 = vector.shape_cast %0 : vector<1x8x128xf32> to vector<8x128xf32>
    %c0_2 = arith.constant 0 : index
    %c0_3 = arith.constant 0 : index
    %c0_4 = arith.constant 0 : index
    %c0_5 = arith.constant 0 : index
    %2 = vector.load %arg2[%c0_2, %c0_3, %c0_4, %c0_5] : memref<8x3x8x8xf32, #tpu.memory_space<vmem>>, vector<1x1x8x8xf32>
    %3 = vector.shape_cast %2 : vector<1x1x8x8xf32> to vector<8x8xf32>
    %cst = arith.constant 0.000000e+00 : f32
    %4 = vector.broadcast %cst : f32 to vector<8x2xf32>
    %5 = vector.extract_strided_slice %1 {offsets = [0, 0], sizes = [8, 126], strides = [1, 1]} : vector<8x128xf32> to vector<8x126xf32>
    %6 = tpu.concatenate %4, %5 in 1 : vector<8x2xf32>, vector<8x126xf32> -> vector<8x128xf32>
    %cst_6 = arith.constant dense<0.000000e+00> : vector<8x128xf32>
    %7 = tpu.matmul %3, %6, %cst_6 {dimension_numbers = #tpu.dot_dimension_numbers<[1], [0], [0], [1], [0, 0, 1, 1], [], []>} : vector<8x8xf32>, vector<8x128xf32>, vector<8x128xf32> -> vector<8x128xf32>
    %c0_7 = arith.constant 0 : index
    %c1 = arith.constant 1 : index
    %c0_8 = arith.constant 0 : index
    %c0_9 = arith.constant 0 : index
    %8 = vector.load %arg2[%c0_7, %c1, %c0_8, %c0_9] : memref<8x3x8x8xf32, #tpu.memory_space<vmem>>, vector<1x1x8x8xf32>
    %9 = vector.shape_cast %8 : vector<1x1x8x8xf32> to vector<8x8xf32>
    %cst_10 = arith.constant 0.000000e+00 : f32
    %10 = vector.broadcast %cst_10 : f32 to vector<8x1xf32>
    %11 = vector.extract_strided_slice %1 {offsets = [0, 0], sizes = [8, 127], strides = [1, 1]} : vector<8x128xf32> to vector<8x127xf32>
    %12 = tpu.concatenate %10, %11 in 1 : vector<8x1xf32>, vector<8x127xf32> -> vector<8x128xf32>
    %cst_11 = arith.constant dense<0.000000e+00> : vector<8x128xf32>
    %13 = tpu.matmul %9, %12, %cst_11 {dimension_numbers = #tpu.dot_dimension_numbers<[1], [0], [0], [1], [0, 0, 1, 1], [], []>} : vector<8x8xf32>, vector<8x128xf32>, vector<8x128xf32> -> vector<8x128xf32>
    %14 = arith.addf %7, %13 : vector<8x128xf32>
    %c0_12 = arith.constant 0 : index
    %c2 = arith.constant 2 : index
    %c0_13 = arith.constant 0 : index
    %c0_14 = arith.constant 0 : index
    %15 = vector.load %arg2[%c0_12, %c2, %c0_13, %c0_14] : memref<8x3x8x8xf32, #tpu.memory_space<vmem>>, vector<1x1x8x8xf32>
    %16 = vector.shape_cast %15 : vector<1x1x8x8xf32> to vector<8x8xf32>
    %cst_15 = arith.constant dense<0.000000e+00> : vector<8x128xf32>
    %17 = tpu.matmul %16, %1, %cst_15 {dimension_numbers = #tpu.dot_dimension_numbers<[1], [0], [0], [1], [0, 0, 1, 1], [], []>} : vector<8x8xf32>, vector<8x128xf32>, vector<8x128xf32> -> vector<8x128xf32>
    %18 = arith.addf %14, %17 : vector<8x128xf32>
    %c0_16 = arith.constant 0 : index
    %c0_17 = arith.constant 0 : index
    %c0_18 = arith.constant 0 : index
    %19 = vector.load %arg3[%c0_16, %c0_17, %c0_18] : memref<8x8x1xf32, #tpu.memory_space<vmem>>, vector<1x8x1xf32>
    %20 = vector.shape_cast %19 : vector<1x8x1xf32> to vector<8x1xf32>
    %21 = vector.broadcast %20 : vector<8x1xf32> to vector<8x128xf32>
    %22 = arith.addf %18, %21 : vector<8x128xf32>
    %cst_19 = arith.constant 0.000000e+00 : f32
    %23 = vector.broadcast %cst_19 : f32 to vector<8x128xf32>
    %24 = arith.cmpf ogt, %22, %23 : vector<8x128xf32>
    %cst_20 = arith.constant 0.00999999977 : f32
    %25 = vector.broadcast %cst_20 : f32 to vector<8x128xf32>
    %26 = arith.mulf %25, %22 : vector<8x128xf32>
    %27 = arith.select %24, %22, %26 : vector<8x128xi1>, vector<8x128xf32>
    %c1_21 = arith.constant 1 : index
    %c0_22 = arith.constant 0 : index
    %c0_23 = arith.constant 0 : index
    %c0_24 = arith.constant 0 : index
    %28 = vector.load %arg2[%c1_21, %c0_22, %c0_23, %c0_24] : memref<8x3x8x8xf32, #tpu.memory_space<vmem>>, vector<1x1x8x8xf32>
    %29 = vector.shape_cast %28 : vector<1x1x8x8xf32> to vector<8x8xf32>
    %30 = vector.extract_strided_slice %27 {offsets = [0, 0], sizes = [8, 126], strides = [1, 1]} : vector<8x128xf32> to vector<8x126xf32>
    %31 = tpu.concatenate %4, %30 in 1 : vector<8x2xf32>, vector<8x126xf32> -> vector<8x128xf32>
    %cst_25 = arith.constant dense<0.000000e+00> : vector<8x128xf32>
    %32 = tpu.matmul %29, %31, %cst_25 {dimension_numbers = #tpu.dot_dimension_numbers<[1], [0], [0], [1], [0, 0, 1, 1], [], []>} : vector<8x8xf32>, vector<8x128xf32>, vector<8x128xf32> -> vector<8x128xf32>
    %c1_26 = arith.constant 1 : index
    %c1_27 = arith.constant 1 : index
    %c0_28 = arith.constant 0 : index
    %c0_29 = arith.constant 0 : index
    %33 = vector.load %arg2[%c1_26, %c1_27, %c0_28, %c0_29] : memref<8x3x8x8xf32, #tpu.memory_space<vmem>>, vector<1x1x8x8xf32>
    %34 = vector.shape_cast %33 : vector<1x1x8x8xf32> to vector<8x8xf32>
    %35 = vector.extract_strided_slice %27 {offsets = [0, 0], sizes = [8, 127], strides = [1, 1]} : vector<8x128xf32> to vector<8x127xf32>
    %36 = tpu.concatenate %10, %35 in 1 : vector<8x1xf32>, vector<8x127xf32> -> vector<8x128xf32>
    %cst_30 = arith.constant dense<0.000000e+00> : vector<8x128xf32>
    %37 = tpu.matmul %34, %36, %cst_30 {dimension_numbers = #tpu.dot_dimension_numbers<[1], [0], [0], [1], [0, 0, 1, 1], [], []>} : vector<8x8xf32>, vector<8x128xf32>, vector<8x128xf32> -> vector<8x128xf32>
    %38 = arith.addf %32, %37 : vector<8x128xf32>
    %c1_31 = arith.constant 1 : index
    %c2_32 = arith.constant 2 : index
    %c0_33 = arith.constant 0 : index
    %c0_34 = arith.constant 0 : index
    %39 = vector.load %arg2[%c1_31, %c2_32, %c0_33, %c0_34] : memref<8x3x8x8xf32, #tpu.memory_space<vmem>>, vector<1x1x8x8xf32>
    %40 = vector.shape_cast %39 : vector<1x1x8x8xf32> to vector<8x8xf32>
    %cst_35 = arith.constant dense<0.000000e+00> : vector<8x128xf32>
    %41 = tpu.matmul %40, %27, %cst_35 {dimension_numbers = #tpu.dot_dimension_numbers<[1], [0], [0], [1], [0, 0, 1, 1], [], []>} : vector<8x8xf32>, vector<8x128xf32>, vector<8x128xf32> -> vector<8x128xf32>
    %42 = arith.addf %38, %41 : vector<8x128xf32>
    %c1_36 = arith.constant 1 : index
    %c0_37 = arith.constant 0 : index
    %c0_38 = arith.constant 0 : index
    %43 = vector.load %arg3[%c1_36, %c0_37, %c0_38] : memref<8x8x1xf32, #tpu.memory_space<vmem>>, vector<1x8x1xf32>
    %44 = vector.shape_cast %43 : vector<1x8x1xf32> to vector<8x1xf32>
    %45 = vector.broadcast %44 : vector<8x1xf32> to vector<8x128xf32>
    %46 = arith.addf %42, %45 : vector<8x128xf32>
    %cst_39 = arith.constant 0.000000e+00 : f32
    %47 = vector.broadcast %cst_39 : f32 to vector<8x128xf32>
    %48 = arith.cmpf ogt, %46, %47 : vector<8x128xf32>
    %cst_40 = arith.constant 0.00999999977 : f32
    %49 = vector.broadcast %cst_40 : f32 to vector<8x128xf32>
    %50 = arith.mulf %49, %46 : vector<8x128xf32>
    %51 = arith.select %48, %46, %50 : vector<8x128xi1>, vector<8x128xf32>
    %c2_41 = arith.constant 2 : index
    %c0_42 = arith.constant 0 : index
    %c0_43 = arith.constant 0 : index
    %c0_44 = arith.constant 0 : index
    %52 = vector.load %arg2[%c2_41, %c0_42, %c0_43, %c0_44] : memref<8x3x8x8xf32, #tpu.memory_space<vmem>>, vector<1x1x8x8xf32>
    %53 = vector.shape_cast %52 : vector<1x1x8x8xf32> to vector<8x8xf32>
    %cst_45 = arith.constant dense<0.000000e+00> : vector<8x128xf32>
    %54 = tpu.matmul %53, %1, %cst_45 {dimension_numbers = #tpu.dot_dimension_numbers<[1], [0], [0], [1], [0, 0, 1, 1], [], []>} : vector<8x8xf32>, vector<8x128xf32>, vector<8x128xf32> -> vector<8x128xf32>
    %c2_46 = arith.constant 2 : index
    %c0_47 = arith.constant 0 : index
    %c0_48 = arith.constant 0 : index
    %55 = vector.load %arg3[%c2_46, %c0_47, %c0_48] : memref<8x8x1xf32, #tpu.memory_space<vmem>>, vector<1x8x1xf32>
    %56 = vector.shape_cast %55 : vector<1x8x1xf32> to vector<8x1xf32>
    %57 = vector.broadcast %56 : vector<8x1xf32> to vector<8x128xf32>
    %58 = arith.addf %54, %57 : vector<8x128xf32>
    %59 = arith.addf %51, %58 : vector<8x128xf32>
    %c3 = arith.constant 3 : index
    %c0_49 = arith.constant 0 : index
    %c0_50 = arith.constant 0 : index
    %c0_51 = arith.constant 0 : index
    %60 = vector.load %arg2[%c3, %c0_49, %c0_50, %c0_51] : memref<8x3x8x8xf32, #tpu.memory_space<vmem>>, vector<1x1x8x8xf32>
    %61 = vector.shape_cast %60 : vector<1x1x8x8xf32> to vector<8x8xf32>
    %cst_52 = arith.constant 0.000000e+00 : f32
    %62 = vector.broadcast %cst_52 : f32 to vector<8x4xf32>
    %63 = vector.extract_strided_slice %59 {offsets = [0, 0], sizes = [8, 124], strides = [1, 1]} : vector<8x128xf32> to vector<8x124xf32>
    %64 = tpu.concatenate %62, %63 in 1 : vector<8x4xf32>, vector<8x124xf32> -> vector<8x128xf32>
    %cst_53 = arith.constant dense<0.000000e+00> : vector<8x128xf32>
    %65 = tpu.matmul %61, %64, %cst_53 {dimension_numbers = #tpu.dot_dimension_numbers<[1], [0], [0], [1], [0, 0, 1, 1], [], []>} : vector<8x8xf32>, vector<8x128xf32>, vector<8x128xf32> -> vector<8x128xf32>
    %c3_54 = arith.constant 3 : index
    %c1_55 = arith.constant 1 : index
    %c0_56 = arith.constant 0 : index
    %c0_57 = arith.constant 0 : index
    %66 = vector.load %arg2[%c3_54, %c1_55, %c0_56, %c0_57] : memref<8x3x8x8xf32, #tpu.memory_space<vmem>>, vector<1x1x8x8xf32>
    %67 = vector.shape_cast %66 : vector<1x1x8x8xf32> to vector<8x8xf32>
    %68 = vector.extract_strided_slice %59 {offsets = [0, 0], sizes = [8, 126], strides = [1, 1]} : vector<8x128xf32> to vector<8x126xf32>
    %69 = tpu.concatenate %4, %68 in 1 : vector<8x2xf32>, vector<8x126xf32> -> vector<8x128xf32>
    %cst_58 = arith.constant dense<0.000000e+00> : vector<8x128xf32>
    %70 = tpu.matmul %67, %69, %cst_58 {dimension_numbers = #tpu.dot_dimension_numbers<[1], [0], [0], [1], [0, 0, 1, 1], [], []>} : vector<8x8xf32>, vector<8x128xf32>, vector<8x128xf32> -> vector<8x128xf32>
    %71 = arith.addf %65, %70 : vector<8x128xf32>
    %c3_59 = arith.constant 3 : index
    %c2_60 = arith.constant 2 : index
    %c0_61 = arith.constant 0 : index
    %c0_62 = arith.constant 0 : index
    %72 = vector.load %arg2[%c3_59, %c2_60, %c0_61, %c0_62] : memref<8x3x8x8xf32, #tpu.memory_space<vmem>>, vector<1x1x8x8xf32>
    %73 = vector.shape_cast %72 : vector<1x1x8x8xf32> to vector<8x8xf32>
    %cst_63 = arith.constant dense<0.000000e+00> : vector<8x128xf32>
    %74 = tpu.matmul %73, %59, %cst_63 {dimension_numbers = #tpu.dot_dimension_numbers<[1], [0], [0], [1], [0, 0, 1, 1], [], []>} : vector<8x8xf32>, vector<8x128xf32>, vector<8x128xf32> -> vector<8x128xf32>
    %75 = arith.addf %71, %74 : vector<8x128xf32>
    %c3_64 = arith.constant 3 : index
    %c0_65 = arith.constant 0 : index
    %c0_66 = arith.constant 0 : index
    %76 = vector.load %arg3[%c3_64, %c0_65, %c0_66] : memref<8x8x1xf32, #tpu.memory_space<vmem>>, vector<1x8x1xf32>
    %77 = vector.shape_cast %76 : vector<1x8x1xf32> to vector<8x1xf32>
    %78 = vector.broadcast %77 : vector<8x1xf32> to vector<8x128xf32>
    %79 = arith.addf %75, %78 : vector<8x128xf32>
    %cst_67 = arith.constant 0.000000e+00 : f32
    %80 = vector.broadcast %cst_67 : f32 to vector<8x128xf32>
    %81 = arith.cmpf ogt, %79, %80 : vector<8x128xf32>
    %cst_68 = arith.constant 0.00999999977 : f32
    %82 = vector.broadcast %cst_68 : f32 to vector<8x128xf32>
    %83 = arith.mulf %82, %79 : vector<8x128xf32>
    %84 = arith.select %81, %79, %83 : vector<8x128xi1>, vector<8x128xf32>
    %c4 = arith.constant 4 : index
    %c0_69 = arith.constant 0 : index
    %c0_70 = arith.constant 0 : index
    %c0_71 = arith.constant 0 : index
    %85 = vector.load %arg2[%c4, %c0_69, %c0_70, %c0_71] : memref<8x3x8x8xf32, #tpu.memory_space<vmem>>, vector<1x1x8x8xf32>
    %86 = vector.shape_cast %85 : vector<1x1x8x8xf32> to vector<8x8xf32>
    %87 = vector.extract_strided_slice %84 {offsets = [0, 0], sizes = [8, 124], strides = [1, 1]} : vector<8x128xf32> to vector<8x124xf32>
    %88 = tpu.concatenate %62, %87 in 1 : vector<8x4xf32>, vector<8x124xf32> -> vector<8x128xf32>
    %cst_72 = arith.constant dense<0.000000e+00> : vector<8x128xf32>
    %89 = tpu.matmul %86, %88, %cst_72 {dimension_numbers = #tpu.dot_dimension_numbers<[1], [0], [0], [1], [0, 0, 1, 1], [], []>} : vector<8x8xf32>, vector<8x128xf32>, vector<8x128xf32> -> vector<8x128xf32>
    %c4_73 = arith.constant 4 : index
    %c1_74 = arith.constant 1 : index
    %c0_75 = arith.constant 0 : index
    %c0_76 = arith.constant 0 : index
    %90 = vector.load %arg2[%c4_73, %c1_74, %c0_75, %c0_76] : memref<8x3x8x8xf32, #tpu.memory_space<vmem>>, vector<1x1x8x8xf32>
    %91 = vector.shape_cast %90 : vector<1x1x8x8xf32> to vector<8x8xf32>
    %92 = vector.extract_strided_slice %84 {offsets = [0, 0], sizes = [8, 126], strides = [1, 1]} : vector<8x128xf32> to vector<8x126xf32>
    %93 = tpu.concatenate %4, %92 in 1 : vector<8x2xf32>, vector<8x126xf32> -> vector<8x128xf32>
    %cst_77 = arith.constant dense<0.000000e+00> : vector<8x128xf32>
    %94 = tpu.matmul %91, %93, %cst_77 {dimension_numbers = #tpu.dot_dimension_numbers<[1], [0], [0], [1], [0, 0, 1, 1], [], []>} : vector<8x8xf32>, vector<8x128xf32>, vector<8x128xf32> -> vector<8x128xf32>
    %95 = arith.addf %89, %94 : vector<8x128xf32>
    %c4_78 = arith.constant 4 : index
    %c2_79 = arith.constant 2 : index
    %c0_80 = arith.constant 0 : index
    %c0_81 = arith.constant 0 : index
    %96 = vector.load %arg2[%c4_78, %c2_79, %c0_80, %c0_81] : memref<8x3x8x8xf32, #tpu.memory_space<vmem>>, vector<1x1x8x8xf32>
    %97 = vector.shape_cast %96 : vector<1x1x8x8xf32> to vector<8x8xf32>
    %cst_82 = arith.constant dense<0.000000e+00> : vector<8x128xf32>
    %98 = tpu.matmul %97, %84, %cst_82 {dimension_numbers = #tpu.dot_dimension_numbers<[1], [0], [0], [1], [0, 0, 1, 1], [], []>} : vector<8x8xf32>, vector<8x128xf32>, vector<8x128xf32> -> vector<8x128xf32>
    %99 = arith.addf %95, %98 : vector<8x128xf32>
    %c4_83 = arith.constant 4 : index
    %c0_84 = arith.constant 0 : index
    %c0_85 = arith.constant 0 : index
    %100 = vector.load %arg3[%c4_83, %c0_84, %c0_85] : memref<8x8x1xf32, #tpu.memory_space<vmem>>, vector<1x8x1xf32>
    %101 = vector.shape_cast %100 : vector<1x8x1xf32> to vector<8x1xf32>
    %102 = vector.broadcast %101 : vector<8x1xf32> to vector<8x128xf32>
    %103 = arith.addf %99, %102 : vector<8x128xf32>
    %cst_86 = arith.constant 0.000000e+00 : f32
    %104 = vector.broadcast %cst_86 : f32 to vector<8x128xf32>
    %105 = arith.cmpf ogt, %103, %104 : vector<8x128xf32>
    %cst_87 = arith.constant 0.00999999977 : f32
    %106 = vector.broadcast %cst_87 : f32 to vector<8x128xf32>
    %107 = arith.mulf %106, %103 : vector<8x128xf32>
    %108 = arith.select %105, %103, %107 : vector<8x128xi1>, vector<8x128xf32>
    %109 = arith.addf %108, %59 : vector<8x128xf32>
    %c5 = arith.constant 5 : index
    %c0_88 = arith.constant 0 : index
    %c0_89 = arith.constant 0 : index
    %c0_90 = arith.constant 0 : index
    %110 = vector.load %arg2[%c5, %c0_88, %c0_89, %c0_90] : memref<8x3x8x8xf32, #tpu.memory_space<vmem>>, vector<1x1x8x8xf32>
    %111 = vector.shape_cast %110 : vector<1x1x8x8xf32> to vector<8x8xf32>
    %cst_91 = arith.constant 0.000000e+00 : f32
    %112 = vector.broadcast %cst_91 : f32 to vector<8x8xf32>
    %113 = vector.extract_strided_slice %109 {offsets = [0, 0], sizes = [8, 120], strides = [1, 1]} : vector<8x128xf32> to vector<8x120xf32>
    %114 = tpu.concatenate %112, %113 in 1 : vector<8x8xf32>, vector<8x120xf32> -> vector<8x128xf32>
    %cst_92 = arith.constant dense<0.000000e+00> : vector<8x128xf32>
    %115 = tpu.matmul %111, %114, %cst_92 {dimension_numbers = #tpu.dot_dimension_numbers<[1], [0], [0], [1], [0, 0, 1, 1], [], []>} : vector<8x8xf32>, vector<8x128xf32>, vector<8x128xf32> -> vector<8x128xf32>
    %c5_93 = arith.constant 5 : index
    %c1_94 = arith.constant 1 : index
    %c0_95 = arith.constant 0 : index
    %c0_96 = arith.constant 0 : index
    %116 = vector.load %arg2[%c5_93, %c1_94, %c0_95, %c0_96] : memref<8x3x8x8xf32, #tpu.memory_space<vmem>>, vector<1x1x8x8xf32>
    %117 = vector.shape_cast %116 : vector<1x1x8x8xf32> to vector<8x8xf32>
    %118 = vector.extract_strided_slice %109 {offsets = [0, 0], sizes = [8, 124], strides = [1, 1]} : vector<8x128xf32> to vector<8x124xf32>
    %119 = tpu.concatenate %62, %118 in 1 : vector<8x4xf32>, vector<8x124xf32> -> vector<8x128xf32>
    %cst_97 = arith.constant dense<0.000000e+00> : vector<8x128xf32>
    %120 = tpu.matmul %117, %119, %cst_97 {dimension_numbers = #tpu.dot_dimension_numbers<[1], [0], [0], [1], [0, 0, 1, 1], [], []>} : vector<8x8xf32>, vector<8x128xf32>, vector<8x128xf32> -> vector<8x128xf32>
    %121 = arith.addf %115, %120 : vector<8x128xf32>
    %c5_98 = arith.constant 5 : index
    %c2_99 = arith.constant 2 : index
    %c0_100 = arith.constant 0 : index
    %c0_101 = arith.constant 0 : index
    %122 = vector.load %arg2[%c5_98, %c2_99, %c0_100, %c0_101] : memref<8x3x8x8xf32, #tpu.memory_space<vmem>>, vector<1x1x8x8xf32>
    %123 = vector.shape_cast %122 : vector<1x1x8x8xf32> to vector<8x8xf32>
    %cst_102 = arith.constant dense<0.000000e+00> : vector<8x128xf32>
    %124 = tpu.matmul %123, %109, %cst_102 {dimension_numbers = #tpu.dot_dimension_numbers<[1], [0], [0], [1], [0, 0, 1, 1], [], []>} : vector<8x8xf32>, vector<8x128xf32>, vector<8x128xf32> -> vector<8x128xf32>
    %125 = arith.addf %121, %124 : vector<8x128xf32>
    %c5_103 = arith.constant 5 : index
    %c0_104 = arith.constant 0 : index
    %c0_105 = arith.constant 0 : index
    %126 = vector.load %arg3[%c5_103, %c0_104, %c0_105] : memref<8x8x1xf32, #tpu.memory_space<vmem>>, vector<1x8x1xf32>
    %127 = vector.shape_cast %126 : vector<1x8x1xf32> to vector<8x1xf32>
    %128 = vector.broadcast %127 : vector<8x1xf32> to vector<8x128xf32>
    %129 = arith.addf %125, %128 : vector<8x128xf32>
    %cst_106 = arith.constant 0.000000e+00 : f32
    %130 = vector.broadcast %cst_106 : f32 to vector<8x128xf32>
    %131 = arith.cmpf ogt, %129, %130 : vector<8x128xf32>
    %cst_107 = arith.constant 0.00999999977 : f32
    %132 = vector.broadcast %cst_107 : f32 to vector<8x128xf32>
    %133 = arith.mulf %132, %129 : vector<8x128xf32>
    %134 = arith.select %131, %129, %133 : vector<8x128xi1>, vector<8x128xf32>
    %c6 = arith.constant 6 : index
    %c0_108 = arith.constant 0 : index
    %c0_109 = arith.constant 0 : index
    %c0_110 = arith.constant 0 : index
    %135 = vector.load %arg2[%c6, %c0_108, %c0_109, %c0_110] : memref<8x3x8x8xf32, #tpu.memory_space<vmem>>, vector<1x1x8x8xf32>
    %136 = vector.shape_cast %135 : vector<1x1x8x8xf32> to vector<8x8xf32>
    %137 = vector.extract_strided_slice %134 {offsets = [0, 0], sizes = [8, 120], strides = [1, 1]} : vector<8x128xf32> to vector<8x120xf32>
    %138 = tpu.concatenate %112, %137 in 1 : vector<8x8xf32>, vector<8x120xf32> -> vector<8x128xf32>
    %cst_111 = arith.constant dense<0.000000e+00> : vector<8x128xf32>
    %139 = tpu.matmul %136, %138, %cst_111 {dimension_numbers = #tpu.dot_dimension_numbers<[1], [0], [0], [1], [0, 0, 1, 1], [], []>} : vector<8x8xf32>, vector<8x128xf32>, vector<8x128xf32> -> vector<8x128xf32>
    %c6_112 = arith.constant 6 : index
    %c1_113 = arith.constant 1 : index
    %c0_114 = arith.constant 0 : index
    %c0_115 = arith.constant 0 : index
    %140 = vector.load %arg2[%c6_112, %c1_113, %c0_114, %c0_115] : memref<8x3x8x8xf32, #tpu.memory_space<vmem>>, vector<1x1x8x8xf32>
    %141 = vector.shape_cast %140 : vector<1x1x8x8xf32> to vector<8x8xf32>
    %142 = vector.extract_strided_slice %134 {offsets = [0, 0], sizes = [8, 124], strides = [1, 1]} : vector<8x128xf32> to vector<8x124xf32>
    %143 = tpu.concatenate %62, %142 in 1 : vector<8x4xf32>, vector<8x124xf32> -> vector<8x128xf32>
    %cst_116 = arith.constant dense<0.000000e+00> : vector<8x128xf32>
    %144 = tpu.matmul %141, %143, %cst_116 {dimension_numbers = #tpu.dot_dimension_numbers<[1], [0], [0], [1], [0, 0, 1, 1], [], []>} : vector<8x8xf32>, vector<8x128xf32>, vector<8x128xf32> -> vector<8x128xf32>
    %145 = arith.addf %139, %144 : vector<8x128xf32>
    %c6_117 = arith.constant 6 : index
    %c2_118 = arith.constant 2 : index
    %c0_119 = arith.constant 0 : index
    %c0_120 = arith.constant 0 : index
    %146 = vector.load %arg2[%c6_117, %c2_118, %c0_119, %c0_120] : memref<8x3x8x8xf32, #tpu.memory_space<vmem>>, vector<1x1x8x8xf32>
    %147 = vector.shape_cast %146 : vector<1x1x8x8xf32> to vector<8x8xf32>
    %cst_121 = arith.constant dense<0.000000e+00> : vector<8x128xf32>
    %148 = tpu.matmul %147, %134, %cst_121 {dimension_numbers = #tpu.dot_dimension_numbers<[1], [0], [0], [1], [0, 0, 1, 1], [], []>} : vector<8x8xf32>, vector<8x128xf32>, vector<8x128xf32> -> vector<8x128xf32>
    %149 = arith.addf %145, %148 : vector<8x128xf32>
    %c6_122 = arith.constant 6 : index
    %c0_123 = arith.constant 0 : index
    %c0_124 = arith.constant 0 : index
    %150 = vector.load %arg3[%c6_122, %c0_123, %c0_124] : memref<8x8x1xf32, #tpu.memory_space<vmem>>, vector<1x8x1xf32>
    %151 = vector.shape_cast %150 : vector<1x8x1xf32> to vector<8x1xf32>
    %152 = vector.broadcast %151 : vector<8x1xf32> to vector<8x128xf32>
    %153 = arith.addf %149, %152 : vector<8x128xf32>
    %cst_125 = arith.constant 0.000000e+00 : f32
    %154 = vector.broadcast %cst_125 : f32 to vector<8x128xf32>
    %155 = arith.cmpf ogt, %153, %154 : vector<8x128xf32>
    %cst_126 = arith.constant 0.00999999977 : f32
    %156 = vector.broadcast %cst_126 : f32 to vector<8x128xf32>
    %157 = arith.mulf %156, %153 : vector<8x128xf32>
    %158 = arith.select %155, %153, %157 : vector<8x128xi1>, vector<8x128xf32>
    %c7 = arith.constant 7 : index
    %c0_127 = arith.constant 0 : index
    %c0_128 = arith.constant 0 : index
    %c0_129 = arith.constant 0 : index
    %159 = vector.load %arg2[%c7, %c0_127, %c0_128, %c0_129] : memref<8x3x8x8xf32, #tpu.memory_space<vmem>>, vector<1x1x8x8xf32>
    %160 = vector.shape_cast %159 : vector<1x1x8x8xf32> to vector<8x8xf32>
    %cst_130 = arith.constant dense<0.000000e+00> : vector<8x128xf32>
    %161 = tpu.matmul %160, %109, %cst_130 {dimension_numbers = #tpu.dot_dimension_numbers<[1], [0], [0], [1], [0, 0, 1, 1], [], []>} : vector<8x8xf32>, vector<8x128xf32>, vector<8x128xf32> -> vector<8x128xf32>
    %c7_131 = arith.constant 7 : index
    %c0_132 = arith.constant 0 : index
    %c0_133 = arith.constant 0 : index
    %162 = vector.load %arg3[%c7_131, %c0_132, %c0_133] : memref<8x8x1xf32, #tpu.memory_space<vmem>>, vector<1x8x1xf32>
    %163 = vector.shape_cast %162 : vector<1x8x1xf32> to vector<8x1xf32>
    %164 = vector.broadcast %163 : vector<8x1xf32> to vector<8x128xf32>
    %165 = arith.addf %161, %164 : vector<8x128xf32>
    %166 = arith.addf %158, %165 : vector<8x128xf32>
    %c0_134 = arith.constant 0 : index
    %c0_135 = arith.constant 0 : index
    %c0_136 = arith.constant 0 : index
    %167 = vector.load %arg4[%c0_134, %c0_135, %c0_136] : memref<1x8x128xf32, #tpu.memory_space<vmem>>, vector<1x8x128xf32>
    %168 = vector.shape_cast %167 : vector<1x8x128xf32> to vector<8x128xf32>
    %169 = vector.shape_cast %166 : vector<8x128xf32> to vector<1x8x128xf32>
    tpu.vector_store %arg4[%c0_134, %c0_135, %c0_136], %169 {strides = array<i32>} : memref<1x8x128xf32, #tpu.memory_space<vmem>>, vector<1x8x128xf32>,
    return
  }
  func.func @transform_0(%arg0: i32) -> (i32, i32, i32) {
    %c0_i32 = arith.constant 0 : i32
    %c0_i32_0 = arith.constant 0 : i32
    %c0_i32_1 = arith.constant 0 : i32
    return %arg0, %c0_i32, %c0_i32_0 : i32, i32, i32
  }
  func.func @transform_1(%arg0: i32) -> (i32, i32, i32, i32) {
    %c0_i32 = arith.constant 0 : i32
    %c0_i32_0 = arith.constant 0 : i32
    %c0_i32_1 = arith.constant 0 : i32
    %c0_i32_2 = arith.constant 0 : i32
    %c0_i32_3 = arith.constant 0 : i32
    return %c0_i32, %c0_i32_0, %c0_i32_1, %c0_i32_2 : i32, i32, i32, i32
  }
  func.func @transform_2(%arg0: i32) -> (i32, i32, i32) {
    %c0_i32 = arith.constant 0 : i32
    %c0_i32_0 = arith.constant 0 : i32
    %c0_i32_1 = arith.constant 0 : i32
    %c0_i32_2 = arith.constant 0 : i32
    return %c0_i32, %c0_i32_0, %c0_i32_1 : i32, i32, i32
  }
  func.func @transform_3(%arg0: i32) -> (i32, i32, i32) {
    %c0_i32 = arith.constant 0 : i32
    %c0_i32_0 = arith.constant 0 : i32
    %c0_i32_1 = arith.constant 0 : i32
    return %arg0, %c0_i32, %c0_i32_0 : i32, i32, i32
  }
}

</mosaic_0001>

<llo_original>
// kernel: tpu_custom_call.1
$region0: #{tpu_custom_call.1}
  #allocation0 [shape = 'u32[]', space=smem, size = 0x4, offset = 0x4, fixed_abs, tag = 'smem constant byte address 0x4 - core index']
  #allocation1 [shape = 'u32[72,128]{1,0:T(1,128)}', space=vmem, size = 0x9000, scoped, tag = 'internal scratch']
  %s0 = inlined_call_operand.vmem [shape: f32[2,8,128], index: 0, kind: input, shape index: {}]
  %s1 = inlined_call_operand.hbm [shape: f32[8,3,8,8], index: 1, kind: input, shape index: {}]
  %s2 = inlined_call_operand.vmem [shape: f32[8,8,1], index: 2, kind: input, shape index: {}]
  %s3 = inlined_call_operand.hbm [shape: f32[2,8,128], index: 3, kind: output, shape index: {}]
  %s4 = sld [smem:[#allocation0]]
  $region49: #{tpu_custom_call.1} parent=0
    _
  %s6 = ssub.s32 1, %s4
  %s7 = scalar_select 0, %s6, %s4
  $region1: #{tpu_custom_call.1} parent=0
    #allocation2 [shape = 'u8[98304]{0}', space=vmem, size = 0x18000, scoped, tag = 'input window, operand 1, single buffered']
    #allocation3 [shape = 's32[2]{0}', space=sflag, size = 0x8, scoped, tag = 'scoped memory for tpu_custom_call.1']
    #allocation4 [shape = 's32[2]{0}', space=sflag, size = 0x8, scoped, tag = 'scoped memory for tpu_custom_call.1']
    #allocation5 [shape = 'u8[8192]{0}', space=vmem, size = 0x2000, scoped, tag = 'output window, operand 0']
    %8 = vsyncpa [#allocation3], 0
    %9 = vsyncpa [#allocation4], 0
    %s10 = scalar_lea.sflag [#allocation4], 1
    %11 = vsyncpa %s10, 0
    loop: start=0, step=1, limit=4
    $region2: #{tpu_custom_call.1} parent=1 // loop_pre_header
      _
    $region3: #{tpu_custom_call.1} parent=1 // loop_header
      %s13 = sphi 0, %s17
      %p14 = scmp.ge.s32.totalorder %s13, 4
      %s23 = sphi 0, %s25
      %s26 = sphi 0, %s23
      %s27 = sphi 0, %s26
      %s43 = sphi 0, %s27
      %s47 = sphi 0, %s47
      %s49 = sphi 0, %s47
      %s50 = sphi 0, %s49
      %s64 = sphi 0, %s50
      %s68 = sphi 0, %s68
      %s70 = sphi 0, %s68
      %s71 = sphi 0, %s70
      %s85 = sphi 0, %s71
      %s91 = sphi 0, %s93
      %s94 = sphi 0, %s91
      %s95 = sphi 0, %s94
      %s111 = sphi 0, %s95
    $region4: #{tpu_custom_call.1} parent=1 // loop_header_branch
      %16 = sbr.rel (%p14) target = $region8
    $region5: #{tpu_custom_call.1} parent=1 // loop_body
      %s18 = ssub.s32 %s13, 1
      %s19 = ssub.s32 %s13, 2
      %s20 = sadd.s32 %s13, 1
      %s21 = ssub.s32 %s13, %s20
      %p22 = scmp.eq.s32.totalorder %s21, 0
      %s24 = sadd.s32 %s23, 1
      %s25 = scalar_select %p22, %s23, %s24
      %p28 = pneg %p22
      %p29 = scmp.eq.s32.totalorder %s13, 1
      %p30 = por %p28, %p29
      %p31 = scmp.ne.s32.totalorder %s23, %s26
      %p32 = scmp.eq.s32.totalorder %s13, 0
      %p33 = por %p31, %p32
      %p34 = scmp.ne.s32.totalorder %s23, %s26
      %p35 = scmp.eq.s32.totalorder %s18, 1
      %p36 = por %p34, %p35
      %p37 = scmp.ne.s32.totalorder %s26, %s27
      %p38 = scmp.eq.s32.totalorder %s18, 0
      %p39 = por %p37, %p38
      %p40 = scmp.ne.s32.totalorder %s26, %s27
      %p41 = scmp.eq.s32.totalorder %s19, 1
      %p42 = por %p40, %p41
      %p44 = scmp.ne.s32.totalorder %s27, %s43
      %p45 = scmp.eq.s32.totalorder %s19, 0
      %p46 = por %p44, %p45
      %s48 = sadd.s32 %s47, 1
      %p51 = scmp.eq.s32.totalorder %s13, 1
      %p52 = scmp.ne.s32.totalorder %s47, %s49
      %p53 = scmp.eq.s32.totalorder %s13, 0
      %p54 = por %p52, %p53
      %p55 = scmp.ne.s32.totalorder %s47, %s49
      %p56 = scmp.eq.s32.totalorder %s18, 1
      %p57 = por %p55, %p56
      %p58 = scmp.ne.s32.totalorder %s49, %s50
      %p59 = scmp.eq.s32.totalorder %s18, 0
      %p60 = por %p58, %p59
      %p61 = scmp.ne.s32.totalorder %s49, %s50
      %p62 = scmp.eq.s32.totalorder %s19, 1
      %p63 = por %p61, %p62
      %p65 = scmp.ne.s32.totalorder %s50, %s64
      %p66 = scmp.eq.s32.totalorder %s19, 0
      %p67 = por %p65, %p66
      %s69 = sadd.s32 %s68, 1
      %p72 = scmp.eq.s32.totalorder %s13, 1
      %p73 = scmp.ne.s32.totalorder %s68, %s70
      %p74 = scmp.eq.s32.totalorder %s13, 0
      %p75 = por %p73, %p74
      %p76 = scmp.ne.s32.totalorder %s68, %s70
      %p77 = scmp.eq.s32.totalorder %s18, 1
      %p78 = por %p76, %p77
      %p79 = scmp.ne.s32.totalorder %s70, %s71
      %p80 = scmp.eq.s32.totalorder %s18, 0
      %p81 = por %p79, %p80
      %p82 = scmp.ne.s32.totalorder %s70, %s71
      %p83 = scmp.eq.s32.totalorder %s19, 1
      %p84 = por %p82, %p83
      %p86 = scmp.ne.s32.totalorder %s71, %s85
      %p87 = scmp.eq.s32.totalorder %s19, 0
      %p88 = por %p86, %p87
      %s89 = ssub.s32 %s13, %s20
      %p90 = scmp.eq.s32.totalorder %s89, 0
      %s92 = sadd.s32 %s91, 1
      %s93 = scalar_select %p90, %s91, %s92
      %p96 = pneg %p90
      %p97 = scmp.eq.s32.totalorder %s13, 1
      %p98 = por %p96, %p97
      %p99 = scmp.ne.s32.totalorder %s91, %s94
      %p100 = scmp.eq.s32.totalorder %s13, 0
      %p101 = por %p99, %p100
      %p102 = scmp.ne.s32.totalorder %s91, %s94
      %p103 = scmp.eq.s32.totalorder %s18, 1
      %p104 = por %p102, %p103
      %p105 = scmp.ne.s32.totalorder %s94, %s95
      %p106 = scmp.eq.s32.totalorder %s18, 0
      %p107 = por %p105, %p106
      %p108 = scmp.ne.s32.totalorder %s94, %s95
      %p109 = scmp.eq.s32.totalorder %s19, 1
      %p110 = por %p108, %p109
      %p112 = scmp.ne.s32.totalorder %s95, %s111
      %p113 = scmp.eq.s32.totalorder %s19, 0
      %p114 = por %p112, %p113
      %p115 = scmp.le.s32.totalorder 1, %s13
      %p116 = scmp.lt.s32.totalorder %s13, 3
      %p117 = pnand %p115, %p116
      %p118 = pneg %p117
      // Predicated region
      $region9: #{tpu_custom_call.1} parent=5 // pred_check
        _
      $region10: #{tpu_custom_call.1} parent=5 // pred_check_branch
        %120 = sbr.rel (%p117) target = $region12
      $region11: #{tpu_custom_call.1} parent=5 // pred_region
        %s121 = ssub.s32 %s13, 1
        // Predicated region
        $region13: #{tpu_custom_call.1} parent=11 // pred_check
          %p122 = pneg %p60
        $region14: #{tpu_custom_call.1} parent=11 // pred_check_branch
          %124 = sbr.rel (%p122) target = $region16
        $region15: #{tpu_custom_call.1} parent=11 // pred_region
          %126 = vsyncadd [#allocation3], 0
          %s127 = sshll.u32 %s1, 4
          %s128 = int_to_ptr.hbm [resolvable:$true] %s127
          %s129 = sshll.u32 [#allocation2], 4
          %s130 = int_to_ptr.vmem [resolvable:$true] %s129
          %135 = dma.hbm_to_vmem [thread:$0]  %s128, 3072, %s130, [#allocation3], 128, 128, 8
        $region16: #{tpu_custom_call.1} parent=11 // pred_fallthru
          _
        // Predicated region
        $region17: #{tpu_custom_call.1} parent=11 // pred_check
          %p136 = pneg %p81
        $region18: #{tpu_custom_call.1} parent=11 // pred_check_branch
          %138 = sbr.rel (%p136) target = $region20
        $region19: #{tpu_custom_call.1} parent=11 // pred_region
          _
        $region20: #{tpu_custom_call.1} parent=11 // pred_fallthru
          _
      $region12: #{tpu_custom_call.1} parent=5 // pred_fallthru
        _
      %p139 = scmp.lt.s32.totalorder %s13, 2
      // Predicated region
      $region21: #{tpu_custom_call.1} parent=5 // pred_check
        %p140 = pneg %p139
      $region22: #{tpu_custom_call.1} parent=5 // pred_check_branch
        %142 = sbr.rel (%p140) target = $region24
      $region23: #{tpu_custom_call.1} parent=5 // pred_region
        // Predicated region
        $region25: #{tpu_custom_call.1} parent=23 // pred_check
          %p143 = pneg %p33
        $region26: #{tpu_custom_call.1} parent=23 // pred_check_branch
          %145 = sbr.rel (%p143) target = $region28
        $region27: #{tpu_custom_call.1} parent=23 // pred_region
          %p146 = scmp.lt.s32.totalorder %s13, 1
          %s147 = scalar_select %p146, %s13, 1
          %s148 = smul.addr %s147, 8
          %s149 = scalar_lea.vmem %s0, %s148
        $region28: #{tpu_custom_call.1} parent=23 // pred_fallthru
          _
      $region24: #{tpu_custom_call.1} parent=5 // pred_fallthru
        _
      %p150 = scmp.le.s32.totalorder 1, %s13
      %p151 = scmp.lt.s32.totalorder %s13, 3
      %p152 = pnand %p150, %p151
      %p153 = pneg %p152
      // Predicated region
      $region29: #{tpu_custom_call.1} parent=5 // pred_check
        _
      $region30: #{tpu_custom_call.1} parent=5 // pred_check_branch
        %155 = sbr.rel (%p152) target = $region32
      $region31: #{tpu_custom_call.1} parent=5 // pred_region
        %s156 = ssub.s32 %s13, 1
        // Predicated region
        $region33: #{tpu_custom_call.1} parent=31 // pred_check
          %p157 = pneg %p60
        $region34: #{tpu_custom_call.1} parent=31 // pred_check_branch
          %159 = sbr.rel (%p157) target = $region36
        $region35: #{tpu_custom_call.1} parent=31 // pred_region
          %161 = dma.done [#allocation3], 3072
        $region36: #{tpu_custom_call.1} parent=31 // pred_fallthru
          _
        %p162 = scmp.lt.s32.totalorder %s18, 1
        %s163 = scalar_select %p162, %s18, 1
        %s164 = smul.addr %s163, 8
        %s165 = scalar_lea.vmem %s0, %s164
        %p166 = pneg %p39
        %p167 = pneg %p36
        %p168 = pneg %p60
        %p169 = pneg %p57
        %p170 = pneg %p81
        %p171 = pneg %p78
        %p172 = pneg %p107
        %p173 = pneg %p104
        %s174 = sand.u32 %s94, 1
        %s175 = scalar_lea.sflag [#allocation4], %s174
        %s176 = sand.u32 %s94, 1
        %s177 = smul.addr %s176, 8
        %s178 = scalar_lea.vmem [#allocation5], %s177
        %p179 = scmp.lt.s32.totalorder %s18, 1
        %s180 = scalar_select %p179, %s18, 1
        %s181 = smul.addr %s180, 8
        %s182 = scalar_lea.vmem %s0, %s181
        %v183 = vld [vmem:[%s182] sm:$0xff]
        %v184 = vld [vmem:[#allocation2] sm:$0xff]
        %186 = vrot.lane.b32.xlu0 %v183, 2
        %v187 = vpop.permute.xlu0 %186
        %vm189 = vcmask 15360
        %v190 = vsel %vm189, 0.0, %v187
        %s191 = scalar_lea.vmem [#allocation2], 8
        %v192 = vld [vmem:[%s191] sm:$0xff]
        %193 = vrot.lane.b32.xlu0 %v183, 1
        %v194 = vpop.permute.xlu0 %193
        %vm196 = vcmask 7168
        %v197 = vsel %vm196, 0.0, %v194
        %vm198 = vcmask 64512
        %v200 = vsel %vm198, %v192, 0
        %202 = vmatpush.msra.mxu0 0.0
        %203 = vmatpush.msra.mxu0 0.0
        %204 = vmatpush.msra.mxu0 0.0
        %205 = vmatpush.msra.mxu0 0.0
        %206 = vmatpush.msra.mxu0 0.0
        %207 = vmatpush.msra.mxu0 0.0
        %208 = vmatpush.msra.mxu0 0.0
        %209 = vmatpush.msra.mxu0 0.0
        %210 = vmatpush.msra.mxu0 0.0
        %211 = vmatpush.msra.mxu0 0.0
        %212 = vmatpush.msra.mxu0 0.0
        %213 = vmatpush.msra.mxu0 0.0
        %214 = vmatpush.msra.mxu0 0.0
        %215 = vmatpush.msra.mxu0 0.0
        %216 = vmatpush.msra.mxu0 0.0
        %217 = vmatpush.msra.mxu0 %v197
        %218 = vmatmul.f32.gmra.mxu0 %v200
        %v219 = vpop.f32.mrf.mxu0
        %v220 = vadd.f32 0.0, %v219
        %221 = vdwg.mxu0
        %v223 = vsel %vm198, %v184, 0
        %225 = vmatpush.msra.mxu0 0.0
        %226 = vmatpush.msra.mxu0 0.0
        %227 = vmatpush.msra.mxu0 0.0
        %228 = vmatpush.msra.mxu0 0.0
        %229 = vmatpush.msra.mxu0 0.0
        %230 = vmatpush.msra.mxu0 0.0
        %231 = vmatpush.msra.mxu0 0.0
        %232 = vmatpush.msra.mxu0 0.0
        %233 = vmatpush.msra.mxu0 0.0
        %234 = vmatpush.msra.mxu0 0.0
        %235 = vmatpush.msra.mxu0 0.0
        %236 = vmatpush.msra.mxu0 0.0
        %237 = vmatpush.msra.mxu0 0.0
        %238 = vmatpush.msra.mxu0 0.0
        %239 = vmatpush.msra.mxu0 0.0
        %240 = vmatpush.msra.mxu0 %v190
        %241 = vmatmul.f32.gmra.mxu0 %v223
        %v242 = vpop.f32.mrf.mxu0
        %v243 = vadd.f32 %v220, %v242
        %244 = vdwg.mxu0
        %s245 = scalar_lea.vmem [#allocation2], 16
        %v246 = vld [vmem:[%s245] sm:$0xff]
        %v248 = vsel %vm198, %v246, 0
        %250 = vmatpush.msra.mxu0 0.0
        %251 = vmatpush.msra.mxu0 0.0
        %252 = vmatpush.msra.mxu0 0.0
        %253 = vmatpush.msra.mxu0 0.0
        %254 = vmatpush.msra.mxu0 0.0
        %255 = vmatpush.msra.mxu0 0.0
        %256 = vmatpush.msra.mxu0 0.0
        %257 = vmatpush.msra.mxu0 0.0
        %258 = vmatpush.msra.mxu0 0.0
        %259 = vmatpush.msra.mxu0 0.0
        %260 = vmatpush.msra.mxu0 0.0
        %261 = vmatpush.msra.mxu0 0.0
        %262 = vmatpush.msra.mxu0 0.0
        %263 = vmatpush.msra.mxu0 0.0
        %264 = vmatpush.msra.mxu0 0.0
        %265 = vmatpush.msra.mxu0 %v183
        %266 = vmatmul.f32.gmra.mxu0 %v248
        %v267 = vpop.f32.mrf.mxu0
        %v268 = vadd.f32 0.0, %v267
        %269 = vdwg.mxu0
        %v270 = vadd.f32 %v243, %v268
        %v271 = vld [vmem:[%s2] sm:$0xff]
        %273 = vset.pattern.permute.xlu0 0
        %274 = vperm.xlu0 %273, %v271
        %v275 = vpop.permute.xlu0 %274
        %v277 = vadd.f32 %v270, %v275
        %vm278 = vcmp.gt.f32.partialorder %v277, 0.0
        %v279 = vmul.f32 %v277, 0.01
        %v280 = vsel %vm278, %v277, %v279
        %s281 = scalar_lea.vmem [#allocation2], 24
        %v282 = vld [vmem:[%s281] sm:$0xff]
        %284 = vrot.lane.b32.xlu0 %v280, 2
        %v285 = vpop.permute.xlu0 %284
        %v287 = vsel %vm189, 0.0, %v285
        %s288 = scalar_lea.vmem [#allocation2], 32
        %v289 = vld [vmem:[%s288] sm:$0xff]
        %290 = vrot.lane.b32.xlu0 %v280, 1
        %v291 = vpop.permute.xlu0 %290
        %v293 = vsel %vm196, 0.0, %v291
        %v295 = vsel %vm198, %v289, 0
        %297 = vmatpush.msra.mxu0 0.0
        %298 = vmatpush.msra.mxu0 0.0
        %299 = vmatpush.msra.mxu0 0.0
        %300 = vmatpush.msra.mxu0 0.0
        %301 = vmatpush.msra.mxu0 0.0
        %302 = vmatpush.msra.mxu0 0.0
        %303 = vmatpush.msra.mxu0 0.0
        %304 = vmatpush.msra.mxu0 0.0
        %305 = vmatpush.msra.mxu0 0.0
        %306 = vmatpush.msra.mxu0 0.0
        %307 = vmatpush.msra.mxu0 0.0
        %308 = vmatpush.msra.mxu0 0.0
        %309 = vmatpush.msra.mxu0 0.0
        %310 = vmatpush.msra.mxu0 0.0
        %311 = vmatpush.msra.mxu0 0.0
        %312 = vmatpush.msra.mxu0 %v293
        %313 = vmatmul.f32.gmra.mxu0 %v295
        %v314 = vpop.f32.mrf.mxu0
        %v315 = vadd.f32 0.0, %v314
        %316 = vdwg.mxu0
        %v318 = vsel %vm198, %v282, 0
        %320 = vmatpush.msra.mxu0 0.0
        %321 = vmatpush.msra.mxu0 0.0
        %322 = vmatpush.msra.mxu0 0.0
        %323 = vmatpush.msra.mxu0 0.0
        %324 = vmatpush.msra.mxu0 0.0
        %325 = vmatpush.msra.mxu0 0.0
        %326 = vmatpush.msra.mxu0 0.0
        %327 = vmatpush.msra.mxu0 0.0
        %328 = vmatpush.msra.mxu0 0.0
        %329 = vmatpush.msra.mxu0 0.0
        %330 = vmatpush.msra.mxu0 0.0
        %331 = vmatpush.msra.mxu0 0.0
        %332 = vmatpush.msra.mxu0 0.0
        %333 = vmatpush.msra.mxu0 0.0
        %334 = vmatpush.msra.mxu0 0.0
        %335 = vmatpush.msra.mxu0 %v287
        %336 = vmatmul.f32.gmra.mxu0 %v318
        %v337 = vpop.f32.mrf.mxu0
        %v338 = vadd.f32 %v315, %v337
        %339 = vdwg.mxu0
        %s340 = scalar_lea.vmem [#allocation2], 40
        %v341 = vld [vmem:[%s340] sm:$0xff]
        %v343 = vsel %vm198, %v341, 0
        %345 = vmatpush.msra.mxu0 0.0
        %346 = vmatpush.msra.mxu0 0.0
        %347 = vmatpush.msra.mxu0 0.0
        %348 = vmatpush.msra.mxu0 0.0
        %349 = vmatpush.msra.mxu0 0.0
        %350 = vmatpush.msra.mxu0 0.0
        %351 = vmatpush.msra.mxu0 0.0
        %352 = vmatpush.msra.mxu0 0.0
        %353 = vmatpush.msra.mxu0 0.0
        %354 = vmatpush.msra.mxu0 0.0
        %355 = vmatpush.msra.mxu0 0.0
        %356 = vmatpush.msra.mxu0 0.0
        %357 = vmatpush.msra.mxu0 0.0
        %358 = vmatpush.msra.mxu0 0.0
        %359 = vmatpush.msra.mxu0 0.0
        %360 = vmatpush.msra.mxu0 %v280
        %361 = vmatmul.f32.gmra.mxu0 %v343
        %v362 = vpop.f32.mrf.mxu0
        %v363 = vadd.f32 0.0, %v362
        %364 = vdwg.mxu0
        %v365 = vadd.f32 %v338, %v363
        %s366 = scalar_lea.vmem %s2, 8
        %v367 = vld [vmem:[%s366] sm:$0xff]
        %369 = vset.pattern.permute.xlu0 0
        %370 = vperm.xlu0 %369, %v367
        %v371 = vpop.permute.xlu0 %370
        %v373 = vadd.f32 %v365, %v371
        %vm374 = vcmp.gt.f32.partialorder %v373, 0.0
        %v375 = vmul.f32 %v373, 0.01
        %v376 = vsel %vm374, %v373, %v375
        %s377 = scalar_lea.vmem [#allocation2], 48
        %v378 = vld [vmem:[%s377] sm:$0xff]
        %s379 = scalar_lea.vmem %s2, 16
        %v380 = vld [vmem:[%s379] sm:$0xff]
        %382 = vset.pattern.permute.xlu0 0
        %383 = vperm.xlu0 %382, %v380
        %v384 = vpop.permute.xlu0 %383
        %v387 = vsel %vm198, %v378, 0
        %389 = vmatpush.msra.mxu0 0.0
        %390 = vmatpush.msra.mxu0 0.0
        %391 = vmatpush.msra.mxu0 0.0
        %392 = vmatpush.msra.mxu0 0.0
        %393 = vmatpush.msra.mxu0 0.0
        %394 = vmatpush.msra.mxu0 0.0
        %395 = vmatpush.msra.mxu0 0.0
        %396 = vmatpush.msra.mxu0 0.0
        %397 = vmatpush.msra.mxu0 0.0
        %398 = vmatpush.msra.mxu0 0.0
        %399 = vmatpush.msra.mxu0 0.0
        %400 = vmatpush.msra.mxu0 0.0
        %401 = vmatpush.msra.mxu0 0.0
        %402 = vmatpush.msra.mxu0 0.0
        %403 = vmatpush.msra.mxu0 0.0
        %404 = vmatpush.msra.mxu0 %v183
        %405 = vmatmul.f32.gmra.mxu0 %v387
        %v406 = vpop.f32.mrf.mxu0
        %v407 = vadd.f32 %v384, %v406
        %408 = vdwg.mxu0
        %v409 = vadd.f32 %v376, %v407
        %s410 = scalar_lea.vmem [#allocation2], 72
        %v411 = vld [vmem:[%s410] sm:$0xff]
        %413 = vrot.lane.b32.xlu0 %v409, 4
        %v414 = vpop.permute.xlu0 %413
        %vm416 = vcmask 31744
        %v417 = vsel %vm416, 0.0, %v414
        %s418 = scalar_lea.vmem [#allocation2], 80
        %v419 = vld [vmem:[%s418] sm:$0xff]
        %420 = vrot.lane.b32.xlu0 %v409, 2
        %v421 = vpop.permute.xlu0 %420
        %v423 = vsel %vm189, 0.0, %v421
        %v425 = vsel %vm198, %v419, 0
        %427 = vmatpush.msra.mxu0 0.0
        %428 = vmatpush.msra.mxu0 0.0
        %429 = vmatpush.msra.mxu0 0.0
        %430 = vmatpush.msra.mxu0 0.0
        %431 = vmatpush.msra.mxu0 0.0
        %432 = vmatpush.msra.mxu0 0.0
        %433 = vmatpush.msra.mxu0 0.0
        %434 = vmatpush.msra.mxu0 0.0
        %435 = vmatpush.msra.mxu0 0.0
        %436 = vmatpush.msra.mxu0 0.0
        %437 = vmatpush.msra.mxu0 0.0
        %438 = vmatpush.msra.mxu0 0.0
        %439 = vmatpush.msra.mxu0 0.0
        %440 = vmatpush.msra.mxu0 0.0
        %441 = vmatpush.msra.mxu0 0.0
        %442 = vmatpush.msra.mxu0 %v423
        %443 = vmatmul.f32.gmra.mxu0 %v425
        %v444 = vpop.f32.mrf.mxu0
        %v445 = vadd.f32 0.0, %v444
        %446 = vdwg.mxu0
        %v448 = vsel %vm198, %v411, 0
        %450 = vmatpush.msra.mxu0 0.0
        %451 = vmatpush.msra.mxu0 0.0
        %452 = vmatpush.msra.mxu0 0.0
        %453 = vmatpush.msra.mxu0 0.0
        %454 = vmatpush.msra.mxu0 0.0
        %455 = vmatpush.msra.mxu0 0.0
        %456 = vmatpush.msra.mxu0 0.0
        %457 = vmatpush.msra.mxu0 0.0
        %458 = vmatpush.msra.mxu0 0.0
        %459 = vmatpush.msra.mxu0 0.0
        %460 = vmatpush.msra.mxu0 0.0
        %461 = vmatpush.msra.mxu0 0.0
        %462 = vmatpush.msra.mxu0 0.0
        %463 = vmatpush.msra.mxu0 0.0
        %464 = vmatpush.msra.mxu0 0.0
        %465 = vmatpush.msra.mxu0 %v417
        %466 = vmatmul.f32.gmra.mxu0 %v448
        %v467 = vpop.f32.mrf.mxu0
        %v468 = vadd.f32 %v445, %v467
        %469 = vdwg.mxu0
        %s470 = scalar_lea.vmem [#allocation2], 88
        %v471 = vld [vmem:[%s470] sm:$0xff]
        %v473 = vsel %vm198, %v471, 0
        %475 = vmatpush.msra.mxu0 0.0
        %476 = vmatpush.msra.mxu0 0.0
        %477 = vmatpush.msra.mxu0 0.0
        %478 = vmatpush.msra.mxu0 0.0
        %479 = vmatpush.msra.mxu0 0.0
        %480 = vmatpush.msra.mxu0 0.0
        %481 = vmatpush.msra.mxu0 0.0
        %482 = vmatpush.msra.mxu0 0.0
        %483 = vmatpush.msra.mxu0 0.0
        %484 = vmatpush.msra.mxu0 0.0
        %485 = vmatpush.msra.mxu0 0.0
        %486 = vmatpush.msra.mxu0 0.0
        %487 = vmatpush.msra.mxu0 0.0
        %488 = vmatpush.msra.mxu0 0.0
        %489 = vmatpush.msra.mxu0 0.0
        %490 = vmatpush.msra.mxu0 %v409
        %491 = vmatmul.f32.gmra.mxu0 %v473
        %v492 = vpop.f32.mrf.mxu0
        %v493 = vadd.f32 0.0, %v492
        %494 = vdwg.mxu0
        %v495 = vadd.f32 %v468, %v493
        %s496 = scalar_lea.vmem %s2, 24
        %v497 = vld [vmem:[%s496] sm:$0xff]
        %499 = vset.pattern.permute.xlu0 0
        %500 = vperm.xlu0 %499, %v497
        %v501 = vpop.permute.xlu0 %500
        %v503 = vadd.f32 %v495, %v501
        %vm504 = vcmp.gt.f32.partialorder %v503, 0.0
        %v505 = vmul.f32 %v503, 0.01
        %v506 = vsel %vm504, %v503, %v505
        %s507 = scalar_lea.vmem [#allocation2], 96
        %v508 = vld [vmem:[%s507] sm:$0xff]
        %510 = vrot.lane.b32.xlu0 %v506, 4
        %v511 = vpop.permute.xlu0 %510
        %v513 = vsel %vm416, 0.0, %v511
        %s514 = scalar_lea.vmem [#allocation2], 104
        %v515 = vld [vmem:[%s514] sm:$0xff]
        %516 = vrot.lane.b32.xlu0 %v506, 2
        %v517 = vpop.permute.xlu0 %516
        %v519 = vsel %vm189, 0.0, %v517
        %v521 = vsel %vm198, %v515, 0
        %523 = vmatpush.msra.mxu0 0.0
        %524 = vmatpush.msra.mxu0 0.0
        %525 = vmatpush.msra.mxu0 0.0
        %526 = vmatpush.msra.mxu0 0.0
        %527 = vmatpush.msra.mxu0 0.0
        %528 = vmatpush.msra.mxu0 0.0
        %529 = vmatpush.msra.mxu0 0.0
        %530 = vmatpush.msra.mxu0 0.0
        %531 = vmatpush.msra.mxu0 0.0
        %532 = vmatpush.msra.mxu0 0.0
        %533 = vmatpush.msra.mxu0 0.0
        %534 = vmatpush.msra.mxu0 0.0
        %535 = vmatpush.msra.mxu0 0.0
        %536 = vmatpush.msra.mxu0 0.0
        %537 = vmatpush.msra.mxu0 0.0
        %538 = vmatpush.msra.mxu0 %v519
        %539 = vmatmul.f32.gmra.mxu0 %v521
        %v540 = vpop.f32.mrf.mxu0
        %v541 = vadd.f32 0.0, %v540
        %542 = vdwg.mxu0
        %v544 = vsel %vm198, %v508, 0
        %546 = vmatpush.msra.mxu0 0.0
        %547 = vmatpush.msra.mxu0 0.0
        %548 = vmatpush.msra.mxu0 0.0
        %549 = vmatpush.msra.mxu0 0.0
        %550 = vmatpush.msra.mxu0 0.0
        %551 = vmatpush.msra.mxu0 0.0
        %552 = vmatpush.msra.mxu0 0.0
        %553 = vmatpush.msra.mxu0 0.0
        %554 = vmatpush.msra.mxu0 0.0
        %555 = vmatpush.msra.mxu0 0.0
        %556 = vmatpush.msra.mxu0 0.0
        %557 = vmatpush.msra.mxu0 0.0
        %558 = vmatpush.msra.mxu0 0.0
        %559 = vmatpush.msra.mxu0 0.0
        %560 = vmatpush.msra.mxu0 0.0
        %561 = vmatpush.msra.mxu0 %v513
        %562 = vmatmul.f32.gmra.mxu0 %v544
        %v563 = vpop.f32.mrf.mxu0
        %v564 = vadd.f32 %v541, %v563
        %565 = vdwg.mxu0
        %s566 = scalar_lea.vmem [#allocation2], 112
        %v567 = vld [vmem:[%s566] sm:$0xff]
        %v569 = vsel %vm198, %v567, 0
        %571 = vmatpush.msra.mxu0 0.0
        %572 = vmatpush.msra.mxu0 0.0
        %573 = vmatpush.msra.mxu0 0.0
        %574 = vmatpush.msra.mxu0 0.0
        %575 = vmatpush.msra.mxu0 0.0
        %576 = vmatpush.msra.mxu0 0.0
        %577 = vmatpush.msra.mxu0 0.0
        %578 = vmatpush.msra.mxu0 0.0
        %579 = vmatpush.msra.mxu0 0.0
        %580 = vmatpush.msra.mxu0 0.0
        %581 = vmatpush.msra.mxu0 0.0
        %582 = vmatpush.msra.mxu0 0.0
        %583 = vmatpush.msra.mxu0 0.0
        %584 = vmatpush.msra.mxu0 0.0
        %585 = vmatpush.msra.mxu0 0.0
        %586 = vmatpush.msra.mxu0 %v506
        %587 = vmatmul.f32.gmra.mxu0 %v569
        %v588 = vpop.f32.mrf.mxu0
        %v589 = vadd.f32 0.0, %v588
        %590 = vdwg.mxu0
        %v591 = vadd.f32 %v564, %v589
        %s592 = scalar_lea.vmem %s2, 32
        %v593 = vld [vmem:[%s592] sm:$0xff]
        %595 = vset.pattern.permute.xlu0 0
        %596 = vperm.xlu0 %595, %v593
        %v597 = vpop.permute.xlu0 %596
        %v599 = vadd.f32 %v591, %v597
        %vm600 = vcmp.gt.f32.partialorder %v599, 0.0
        %v601 = vmul.f32 %v599, 0.01
        %v602 = vsel %vm600, %v599, %v601
        %v603 = vadd.f32 %v602, %v409
        %s604 = scalar_lea.vmem [#allocation2], 120
        %v605 = vld [vmem:[%s604] sm:$0xff]
        %607 = vrot.lane.b32.xlu0 %v603, 8
        %v608 = vpop.permute.xlu0 %607
        %v610 = vsel %vm198, 0.0, %v608
        %s611 = scalar_lea.vmem [#allocation2], 128
        %v612 = vld [vmem:[%s611] sm:$0xff]
        %613 = vrot.lane.b32.xlu0 %v603, 4
        %v614 = vpop.permute.xlu0 %613
        %v616 = vsel %vm416, 0.0, %v614
        %v618 = vsel %vm198, %v612, 0
        %620 = vmatpush.msra.mxu0 0.0
        %621 = vmatpush.msra.mxu0 0.0
        %622 = vmatpush.msra.mxu0 0.0
        %623 = vmatpush.msra.mxu0 0.0
        %624 = vmatpush.msra.mxu0 0.0
        %625 = vmatpush.msra.mxu0 0.0
        %626 = vmatpush.msra.mxu0 0.0
        %627 = vmatpush.msra.mxu0 0.0
        %628 = vmatpush.msra.mxu0 0.0
        %629 = vmatpush.msra.mxu0 0.0
        %630 = vmatpush.msra.mxu0 0.0
        %631 = vmatpush.msra.mxu0 0.0
        %632 = vmatpush.msra.mxu0 0.0
        %633 = vmatpush.msra.mxu0 0.0
        %634 = vmatpush.msra.mxu0 0.0
        %635 = vmatpush.msra.mxu0 %v616
        %636 = vmatmul.f32.gmra.mxu0 %v618
        %v637 = vpop.f32.mrf.mxu0
        %v638 = vadd.f32 0.0, %v637
        %639 = vdwg.mxu0
        %v641 = vsel %vm198, %v605, 0
        %643 = vmatpush.msra.mxu0 0.0
        %644 = vmatpush.msra.mxu0 0.0
        %645 = vmatpush.msra.mxu0 0.0
        %646 = vmatpush.msra.mxu0 0.0
        %647 = vmatpush.msra.mxu0 0.0
        %648 = vmatpush.msra.mxu0 0.0
        %649 = vmatpush.msra.mxu0 0.0
        %650 = vmatpush.msra.mxu0 0.0
        %651 = vmatpush.msra.mxu0 0.0
        %652 = vmatpush.msra.mxu0 0.0
        %653 = vmatpush.msra.mxu0 0.0
        %654 = vmatpush.msra.mxu0 0.0
        %655 = vmatpush.msra.mxu0 0.0
        %656 = vmatpush.msra.mxu0 0.0
        %657 = vmatpush.msra.mxu0 0.0
        %658 = vmatpush.msra.mxu0 %v610
        %659 = vmatmul.f32.gmra.mxu0 %v641
        %v660 = vpop.f32.mrf.mxu0
        %v661 = vadd.f32 %v638, %v660
        %662 = vdwg.mxu0
        %s663 = scalar_lea.vmem [#allocation2], 136
        %v664 = vld [vmem:[%s663] sm:$0xff]
        %v666 = vsel %vm198, %v664, 0
        %668 = vmatpush.msra.mxu0 0.0
        %669 = vmatpush.msra.mxu0 0.0
        %670 = vmatpush.msra.mxu0 0.0
        %671 = vmatpush.msra.mxu0 0.0
        %672 = vmatpush.msra.mxu0 0.0
        %673 = vmatpush.msra.mxu0 0.0
        %674 = vmatpush.msra.mxu0 0.0
        %675 = vmatpush.msra.mxu0 0.0
        %676 = vmatpush.msra.mxu0 0.0
        %677 = vmatpush.msra.mxu0 0.0
        %678 = vmatpush.msra.mxu0 0.0
        %679 = vmatpush.msra.mxu0 0.0
        %680 = vmatpush.msra.mxu0 0.0
        %681 = vmatpush.msra.mxu0 0.0
        %682 = vmatpush.msra.mxu0 0.0
        %683 = vmatpush.msra.mxu0 %v603
        %684 = vmatmul.f32.gmra.mxu0 %v666
        %v685 = vpop.f32.mrf.mxu0
        %v686 = vadd.f32 0.0, %v685
        %687 = vdwg.mxu0
        %v688 = vadd.f32 %v661, %v686
        %s689 = scalar_lea.vmem %s2, 40
        %v690 = vld [vmem:[%s689] sm:$0xff]
        %692 = vset.pattern.permute.xlu0 0
        %693 = vperm.xlu0 %692, %v690
        %v694 = vpop.permute.xlu0 %693
        %v696 = vadd.f32 %v688, %v694
        %vm697 = vcmp.gt.f32.partialorder %v696, 0.0
        %v698 = vmul.f32 %v696, 0.01
        %v699 = vsel %vm697, %v696, %v698
        %s700 = scalar_lea.vmem [#allocation2], 144
        %v701 = vld [vmem:[%s700] sm:$0xff]
        %703 = vrot.lane.b32.xlu0 %v699, 8
        %v704 = vpop.permute.xlu0 %703
        %v706 = vsel %vm198, 0.0, %v704
        %s707 = scalar_lea.vmem [#allocation2], 152
        %v708 = vld [vmem:[%s707] sm:$0xff]
        %709 = vrot.lane.b32.xlu0 %v699, 4
        %v710 = vpop.permute.xlu0 %709
        %v712 = vsel %vm416, 0.0, %v710
        %v714 = vsel %vm198, %v708, 0
        %716 = vmatpush.msra.mxu0 0.0
        %717 = vmatpush.msra.mxu0 0.0
        %718 = vmatpush.msra.mxu0 0.0
        %719 = vmatpush.msra.mxu0 0.0
        %720 = vmatpush.msra.mxu0 0.0
        %721 = vmatpush.msra.mxu0 0.0
        %722 = vmatpush.msra.mxu0 0.0
        %723 = vmatpush.msra.mxu0 0.0
        %724 = vmatpush.msra.mxu0 0.0
        %725 = vmatpush.msra.mxu0 0.0
        %726 = vmatpush.msra.mxu0 0.0
        %727 = vmatpush.msra.mxu0 0.0
        %728 = vmatpush.msra.mxu0 0.0
        %729 = vmatpush.msra.mxu0 0.0
        %730 = vmatpush.msra.mxu0 0.0
        %731 = vmatpush.msra.mxu0 %v712
        %732 = vmatmul.f32.gmra.mxu0 %v714
        %v733 = vpop.f32.mrf.mxu0
        %v734 = vadd.f32 0.0, %v733
        %735 = vdwg.mxu0
        %v737 = vsel %vm198, %v701, 0
        %739 = vmatpush.msra.mxu0 0.0
        %740 = vmatpush.msra.mxu0 0.0
        %741 = vmatpush.msra.mxu0 0.0
        %742 = vmatpush.msra.mxu0 0.0
        %743 = vmatpush.msra.mxu0 0.0
        %744 = vmatpush.msra.mxu0 0.0
        %745 = vmatpush.msra.mxu0 0.0
        %746 = vmatpush.msra.mxu0 0.0
        %747 = vmatpush.msra.mxu0 0.0
        %748 = vmatpush.msra.mxu0 0.0
        %749 = vmatpush.msra.mxu0 0.0
        %750 = vmatpush.msra.mxu0 0.0
        %751 = vmatpush.msra.mxu0 0.0
        %752 = vmatpush.msra.mxu0 0.0
        %753 = vmatpush.msra.mxu0 0.0
        %754 = vmatpush.msra.mxu0 %v706
        %755 = vmatmul.f32.gmra.mxu0 %v737
        %v756 = vpop.f32.mrf.mxu0
        %v757 = vadd.f32 %v734, %v756
        %758 = vdwg.mxu0
        %s759 = scalar_lea.vmem [#allocation2], 160
        %v760 = vld [vmem:[%s759] sm:$0xff]
        %v762 = vsel %vm198, %v760, 0
        %764 = vmatpush.msra.mxu0 0.0
        %765 = vmatpush.msra.mxu0 0.0
        %766 = vmatpush.msra.mxu0 0.0
        %767 = vmatpush.msra.mxu0 0.0
        %768 = vmatpush.msra.mxu0 0.0
        %769 = vmatpush.msra.mxu0 0.0
        %770 = vmatpush.msra.mxu0 0.0
        %771 = vmatpush.msra.mxu0 0.0
        %772 = vmatpush.msra.mxu0 0.0
        %773 = vmatpush.msra.mxu0 0.0
        %774 = vmatpush.msra.mxu0 0.0
        %775 = vmatpush.msra.mxu0 0.0
        %776 = vmatpush.msra.mxu0 0.0
        %777 = vmatpush.msra.mxu0 0.0
        %778 = vmatpush.msra.mxu0 0.0
        %779 = vmatpush.msra.mxu0 %v699
        %780 = vmatmul.f32.gmra.mxu0 %v762
        %v781 = vpop.f32.mrf.mxu0
        %v782 = vadd.f32 0.0, %v781
        %783 = vdwg.mxu0
        %v784 = vadd.f32 %v757, %v782
        %s785 = scalar_lea.vmem %s2, 48
        %v786 = vld [vmem:[%s785] sm:$0xff]
        %788 = vset.pattern.permute.xlu0 0
        %789 = vperm.xlu0 %788, %v786
        %v790 = vpop.permute.xlu0 %789
        %v792 = vadd.f32 %v784, %v790
        %vm793 = vcmp.gt.f32.partialorder %v792, 0.0
        %v794 = vmul.f32 %v792, 0.01
        %v795 = vsel %vm793, %v792, %v794
        %s796 = scalar_lea.vmem [#allocation2], 168
        %v797 = vld [vmem:[%s796] sm:$0xff]
        %s798 = scalar_lea.vmem %s2, 56
        %v799 = vld [vmem:[%s798] sm:$0xff]
        %801 = vset.pattern.permute.xlu0 0
        %802 = vperm.xlu0 %801, %v799
        %v803 = vpop.permute.xlu0 %802
        %v806 = vsel %vm198, %v797, 0
        %808 = vmatpush.msra.mxu0 0.0
        %809 = vmatpush.msra.mxu0 0.0
        %810 = vmatpush.msra.mxu0 0.0
        %811 = vmatpush.msra.mxu0 0.0
        %812 = vmatpush.msra.mxu0 0.0
        %813 = vmatpush.msra.mxu0 0.0
        %814 = vmatpush.msra.mxu0 0.0
        %815 = vmatpush.msra.mxu0 0.0
        %816 = vmatpush.msra.mxu0 0.0
        %817 = vmatpush.msra.mxu0 0.0
        %818 = vmatpush.msra.mxu0 0.0
        %819 = vmatpush.msra.mxu0 0.0
        %820 = vmatpush.msra.mxu0 0.0
        %821 = vmatpush.msra.mxu0 0.0
        %822 = vmatpush.msra.mxu0 0.0
        %823 = vmatpush.msra.mxu0 %v603
        %824 = vmatmul.f32.gmra.mxu0 %v806
        %v825 = vpop.f32.mrf.mxu0
        %v826 = vadd.f32 %v803, %v825
        %827 = vdwg.mxu0
        %v828 = vadd.f32 %v795, %v826
        %829 = vst [vmem:[%s178] sm:$0xff] %v828
        %s830 = sand.u32 %s94, 1
        %s831 = scalar_lea.sflag [#allocation4], %s830
        %s832 = sand.u32 %s94, 1
        %s833 = smul.addr %s832, 8
        %s834 = scalar_lea.vmem [#allocation5], %s833
        // Predicated region
        $region37: #{tpu_custom_call.1} parent=31 // pred_check
          %p835 = pneg %p104
        $region38: #{tpu_custom_call.1} parent=31 // pred_check_branch
          %837 = sbr.rel (%p835) target = $region40
        $region39: #{tpu_custom_call.1} parent=31 // pred_region
          %839 = vsyncadd %s831, 0
          %s840 = smul.addr %s18, 8
          %s841 = scalar_lea.hbm %s3, %s840
          %s843 = sshll.u32 %s834, 4
          %s844 = int_to_ptr.vmem [resolvable:$true] %s843
          %s845 = sshll.u32 %s841, 4
          %s846 = int_to_ptr.hbm [resolvable:$true] %s845
          %848 = dma.vmem_to_hbm [thread:$0]  %s844, 128, %s846, %s831
        $region40: #{tpu_custom_call.1} parent=31 // pred_fallthru
          _
      $region32: #{tpu_custom_call.1} parent=5 // pred_fallthru
        _
      %p849 = scmp.le.s32.totalorder 2, %s13
      // Predicated region
      $region41: #{tpu_custom_call.1} parent=5 // pred_check
        %p850 = pneg %p849
      $region42: #{tpu_custom_call.1} parent=5 // pred_check_branch
        %852 = sbr.rel (%p850) target = $region44
      $region43: #{tpu_custom_call.1} parent=5 // pred_region
        %s853 = ssub.s32 %s13, 2
        // Predicated region
        $region45: #{tpu_custom_call.1} parent=43 // pred_check
          %p854 = pneg %p110
        $region46: #{tpu_custom_call.1} parent=43 // pred_check_branch
          %856 = sbr.rel (%p854) target = $region48
        $region47: #{tpu_custom_call.1} parent=43 // pred_region
          %s857 = sand.u32 %s95, 1
          %s858 = scalar_lea.sflag [#allocation4], %s857
          %s859 = sand.u32 %s95, 1
          %s860 = smul.addr %s859, 8
          %s861 = scalar_lea.vmem [#allocation5], %s860
          %863 = dma.done %s858, 128
        $region48: #{tpu_custom_call.1} parent=43 // pred_fallthru
          _
      $region44: #{tpu_custom_call.1} parent=5 // pred_fallthru
        _
    $region6: #{tpu_custom_call.1} parent=1 // loop_footer
      %s17 = sadd.s32 1, %s13
    $region7: #{tpu_custom_call.1} parent=1 // loop_footer_branch
      %12 = sbr.rel target = $region3
    $region8: #{tpu_custom_call.1} parent=1 // loop_exit
      _
    %864 = vsyncpa [#allocation3], 1
    %s865 = scalar_lea.sflag [#allocation3], 1
    %866 = vsyncpa %s865, 1
    %867 = vsyncpa [#allocation4], 1
    %s868 = scalar_lea.sflag [#allocation4], 1
    %869 = vsyncpa %s868, 1

</llo_original>
